<compile_context>
chip_gen: v7x
topology: tpu7x:2x2x1
jax: 0.10.0
libtpu: 0.0.40
codegen_flags: <defaults>
</compile_context>

<pallas_src>
import functools

import jax
import jax.numpy as jnp
from jax.experimental import pallas as pl
from jax.experimental.pallas import tpu as pltpu


# ---------------------------------------------------------------------------
# Generation-aware VMEM budgets
# ---------------------------------------------------------------------------

def _budgets():
    """VMEM budgets keyed on the chip generation (v5e/v6e: 128 MiB; v7x: 64 MiB/TC)."""
    try:
        vmem = int(pltpu.get_tpu_info().vmem_capacity_bytes)
    except Exception:
        vmem = 64 << 20                      # be conservative if the query fails
    if vmem >= (100 << 20):                  # v5e / v6e class (128 MiB VMEM)
        return dict(vmem_cap=104 << 20, single_pass=88 << 20,
                    two_pass_tile=14 << 20, small_vmem=False)
    # v7x class (64 MiB VMEM per TensorCore)
    return dict(vmem_cap=48 << 20, single_pass=26 << 20,
                two_pass_tile=8 << 20, small_vmem=True)


def _vmem_limit(nbytes, cap):
    return int(min(cap, max(int(nbytes), 16 << 20)))


def _choose_tile_c(C, T, isz, sublane, budget_bytes, tile_c):
    if tile_c is None:
        tile_c = budget_bytes // max(1, T * isz)
    tile_c = max(sublane, (int(tile_c) // sublane) * sublane)
    return C if tile_c >= C else tile_c


# ---------------------------------------------------------------------------
# Kernels
# ---------------------------------------------------------------------------

def _se_single_pass_kernel(x_ref, w1t_ref, b1_ref, w2t_ref, b2_ref, o_ref, *, inv_t):
    x = x_ref[...]                                               # (bt, C, T), native dtype
    # squeeze: f32-accumulated mean over time (single read of x shared with the excite)
    z = jnp.sum(x, axis=-1, dtype=jnp.float32) * inv_t           # (bt, C) f32
    # fc1 + relu, fc2 + sigmoid (PyTorch Linear: z @ W.T + b; weights pre-transposed)
    h = jnp.dot(z, w1t_ref[...], preferred_element_type=jnp.float32) + b1_ref[...]
    h = jnp.maximum(h, 0.0)                                      # (bt, H)
    s = jnp.dot(h, w2t_ref[...], preferred_element_type=jnp.float32) + b2_ref[...]
    s = jax.nn.sigmoid(s)                                        # (bt, C) f32
    # excite: broadcast over time in x's native dtype (no persistent f32 copy of the tile)
    o_ref[...] = x * s.astype(o_ref.dtype)[:, :, None]


def _se_channel_sum_kernel(x_ref, s_ref):
    # (1, tile_c, T) -> (1, tile_c, 1) f32 time-sum.  Pure streaming reduce, no tail mask,
    # no cross-grid accumulation (full T lives inside one contiguous block).
    s_ref[...] = jnp.sum(x_ref[...], axis=-1, keepdims=True, dtype=jnp.float32)


def _se_excite_kernel(x_ref, s_ref, o_ref):
    # (1, tile_c, T) * (1, tile_c, 1) -> (1, tile_c, T) in x's native dtype.
    o_ref[...] = x_ref[...] * s_ref[...].astype(o_ref.dtype)


# ---------------------------------------------------------------------------
# Wrapper
# ---------------------------------------------------------------------------

def prepare_se_params(w1, b1, w2, b2):
    """Pre-transpose / reshape PyTorch-layout Linear params ONCE (hoisted out of the call path).

    w1: (H, C), b1: (H,), w2: (C, H), b2: (C,) -> w1t: (C, H), b1r: (1, H), w2t: (H, C), b2r: (1, C)
    """
    H, C = w1.shape
    return w1.T, b1.reshape(1, H), w2.T, b2.reshape(1, C)


def squeeze_excitation(x, w1t, b1r, w2t, b2r, *, donate_x=False,
                       force_two_pass=False, tile_c=None):
    """x: (B, C, T). Params from prepare_se_params. Returns x * sigmoid(fc2(relu(fc1(mean_T(x)))))."""
    B, C, T = x.shape
    H = w1t.shape[1]
    isz = jnp.dtype(x.dtype).itemsize
    sublane = max(8, 32 // isz)              # 8 for f32, 16 for bf16/f16
    budgets = _budgets()
    cap = budgets["vmem_cap"]
    param_bytes = sum(int(jnp.dtype(a.dtype).itemsize) * a.size for a in (w1t, b1r, w2t, b2r))
    io_alias = {0: 0} if donate_x else {}

    row_bytes = C * T * isz
    row_f32_tmp = C * T * 4 if isz < 4 else 0            # f32 upcast temp of the reduce
    per_row = 4 * row_bytes + row_f32_tmp                 # double-buffered in + out + temp

    single_pass = (not force_two_pass) and (per_row <= budgets["single_pass"])
    # v7x has 2 TensorCores: a grid of (1,) would leave one TC idle.  For B == 1 and a
    # reasonably large x, prefer the two-pass path whose (1, n_c) grids are fully parallel.
    if single_pass and B == 1 and budgets["small_vmem"] and row_bytes >= (4 << 20):
        single_pass = False

    if single_pass:
        bt = max(1, min(B, budgets["single_pass"] // per_row))
        if B >= 2:
            bt = min(bt, pl.cdiv(B, 2))       # keep >= 2 parallel grid steps (megacore)
        limit = _vmem_limit(bt * per_row + 2 * param_bytes + (2 << 20), cap)
        return pl.pallas_call(
            functools.partial(_se_single_pass_kernel, inv_t=1.0 / T),
            out_shape=jax.ShapeDtypeStruct((B, C, T), x.dtype),
            grid_spec=pltpu.PrefetchScalarGridSpec(
                num_scalar_prefetch=0,
                grid=(pl.cdiv(B, bt),),
                in_specs=[
                    pl.BlockSpec((bt, C, T), lambda i: (i, 0, 0)),
                    pl.BlockSpec((C, H), lambda i: (0, 0)),   # weights/bias stay resident
                    pl.BlockSpec((1, H), lambda i: (0, 0)),
                    pl.BlockSpec((H, C), lambda i: (0, 0)),
                    pl.BlockSpec((1, C), lambda i: (0, 0)),
                ],
                out_specs=pl.BlockSpec((bt, C, T), lambda i: (i, 0, 0)),
            ),
            compiler_params=pltpu.CompilerParams(
                dimension_semantics=("parallel",),
                vmem_limit_bytes=limit),
            input_output_aliases=io_alias,
        )(x, w1t, b1r, w2t, b2r)

    # ---- two-pass path (large C*T): channel-tiled streaming reduce, JAX MLP, excite ----
    tile_c = _choose_tile_c(C, T, isz, sublane, budgets["two_pass_tile"], tile_c)
    n_c = pl.cdiv(C, tile_c)
    tile_bytes = tile_c * T * isz
    tile_f32_tmp = tile_c * T * 4 if isz < 4 else 0
    # TODO(synk): absurdly long sequences (min channel tile > VMEM cap) would need an extra
    # time-tiled reduction fallback; irrelevant for realistic ECAPA-TDNN shapes.

    # Pass A: per-(batch, channel) f32 time-sums, fully contiguous DMA blocks.
    limit_a = _vmem_limit(2 * tile_bytes + tile_f32_tmp + 2 * tile_c * 4 + (1 << 20), cap)
    sums = pl.pallas_call(
        _se_channel_sum_kernel,
        out_shape=jax.ShapeDtypeStruct((B, C, 1), jnp.float32),
        grid_spec=pltpu.PrefetchScalarGridSpec(
            num_scalar_prefetch=0,
            grid=(B, n_c),
            in_specs=[pl.BlockSpec((1, tile_c, T), lambda b, c: (b, c, 0))],
            out_specs=pl.BlockSpec((1, tile_c, 1), lambda b, c: (b, c, 0)),
        ),
        compiler_params=pltpu.CompilerParams(
            dimension_semantics=("parallel", "parallel"),
            vmem_limit_bytes=limit_a),
    )(x)

    # Tiny MLP as ONE batched (B, C) matmul in plain JAX (keeps pass A a pure DMA reduce).
    z = sums[:, :, 0] * jnp.float32(1.0 / T)
    h = jnp.maximum(jnp.dot(z, w1t.astype(jnp.float32)) + b1r.astype(jnp.float32), 0.0)
    s = jax.nn.sigmoid(jnp.dot(h, w2t.astype(jnp.float32)) + b2r.astype(jnp.float32))
    scales = s[:, :, None]                                       # (B, C, 1) f32

    # Pass B: excite with large contiguous (1, tile_c, T) blocks.
    # (If a trace ever shows exposed DMA gaps here, pipeline_mode=pl.Buffered(3) on the x
    #  BlockSpec is the cheap knob to sweep — remember to add the third buffer to the limit.)
    limit_b = _vmem_limit(4 * tile_bytes + 2 * tile_c * 4 + (1 << 20), cap)
    return pl.pallas_call(
        _se_excite_kernel,
        out_shape=jax.ShapeDtypeStruct((B, C, T), x.dtype),
        grid_spec=pltpu.PrefetchScalarGridSpec(
            num_scalar_prefetch=0,
            grid=(B, n_c),
            in_specs=[
                pl.BlockSpec((1, tile_c, T), lambda b, c: (b, c, 0)),
                pl.BlockSpec((1, tile_c, 1), lambda b, c: (b, c, 0)),
            ],
            out_specs=pl.BlockSpec((1, tile_c, T), lambda b, c: (b, c, 0)),
        ),
        compiler_params=pltpu.CompilerParams(
            dimension_semantics=("parallel", "parallel"),
            vmem_limit_bytes=limit_b),
        input_output_aliases=io_alias,
    )(x, scales)


# ---------------------------------------------------------------------------
# Reference + test
# ---------------------------------------------------------------------------

def se_reference(x, w1, b1, w2, b2):
    z = jnp.mean(x, axis=-1)
    z = jax.nn.relu(z @ w1.T + b1)
    s = jax.nn.sigmoid(z @ w2.T + b2)[:, :, None]
    return x * s


def _make_case(key, batch, channels, time, reduction=4, dtype=jnp.float32):
    hidden = channels // reduction
    kx, kw1, kb1, kw2, kb2 = jax.random.split(key, 5)
    x = jax.random.normal(kx, (batch, channels, time), dtype=dtype)
    w1 = (0.1 * jax.random.normal(kw1, (hidden, channels))).astype(dtype)
    b1 = (0.1 * jax.random.normal(kb1, (hidden,))).astype(dtype)
    w2 = (0.1 * jax.random.normal(kw2, (channels, hidden))).astype(dtype)
    b2 = (0.1 * jax.random.normal(kb2, (channels,))).astype(dtype)
    return x, w1, b1, w2, b2


if __name__ == "__main__":
    key = jax.random.PRNGKey(0)
    k1, k2 = jax.random.split(key)

    # Case 1: small shape -> single-pass path.  B=3 with bt=2 exercises batch packing
    # (multi-row MXU matmuls) plus a partial trailing batch block.
    x, w1, b1, w2, b2 = _make_case(k1, batch=3, channels=16, time=64, reduction=4)
    params = prepare_se_params(w1, b1, w2, b2)
    out = jax.block_until_ready(squeeze_excitation(x, *params))
    ref = se_reference(x, w1, b1, w2, b2)
    assert out.shape == x.shape
    assert jnp.allclose(out, ref, atol=1e-5, rtol=1e-5), "single-pass mismatch vs. JAX reference"

    # Case 2: force the channel-tiled two-pass path.  C=200 with tile_c=64 exercises a
    # partial last channel block; T=112 exercises a non-128-multiple full-extent time dim.
    x, w1, b1, w2, b2 = _make_case(k2, batch=2, channels=200, time=112, reduction=4)
    params = prepare_se_params(w1, b1, w2, b2)
    out = jax.block_until_ready(
        squeeze_excitation(x, *params, force_two_pass=True, tile_c=64))
    ref = se_reference(x, w1, b1, w2, b2)
    assert out.shape == x.shape
    assert jnp.allclose(out, ref, atol=1e-5, rtol=1e-5), "two-pass mismatch vs. JAX reference"

    print("KERNEL_OK")
</pallas_src>

<mosaic_0001>
module attributes {stable_mosaic.version = 11 : i64} {
  func.func @_se_single_pass_kernel(%arg0: i32, %arg1: memref<2x16x64xf32, #tpu.memory_space<vmem>>, %arg2: memref<16x4xf32, #tpu.memory_space<vmem>>, %arg3: memref<1x4xf32, #tpu.memory_space<vmem>>, %arg4: memref<4x16xf32, #tpu.memory_space<vmem>>, %arg5: memref<1x16xf32, #tpu.memory_space<vmem>>, %arg6: memref<2x16x64xf32, #tpu.memory_space<vmem>>) attributes {dimension_semantics = [#tpu.dimension_semantics<parallel>], iteration_bounds = array<i64: 2>, scalar_prefetch = 0 : i64, scratch_operands = 0 : i64, tpu.core_type = #tpu.core_type<tc>, window_params = [{transform_indices = @transform_0, window_bounds = array<i64: 2, 16, 64>}, {pipeline_mode = #tpu.pipeline_mode<synchronous>, transform_indices = @transform_1, window_bounds = array<i64: 16, 4>}, {pipeline_mode = #tpu.pipeline_mode<synchronous>, transform_indices = @transform_2, window_bounds = array<i64: 1, 4>}, {pipeline_mode = #tpu.pipeline_mode<synchronous>, transform_indices = @transform_3, window_bounds = array<i64: 4, 16>}, {pipeline_mode = #tpu.pipeline_mode<synchronous>, transform_indices = @transform_4, window_bounds = array<i64: 1, 16>}, {transform_indices = @transform_5, window_bounds = array<i64: 2, 16, 64>}]} {
    %c0 = arith.constant 0 : index
    %c0_0 = arith.constant 0 : index
    %c0_1 = arith.constant 0 : index
    %0 = vector.load %arg1[%c0, %c0_0, %c0_1] : memref<2x16x64xf32, #tpu.memory_space<vmem>>, vector<2x16x64xf32>
    %cst = arith.constant dense<0.000000e+00> : vector<2x16xf32>
    %1 = vector.multi_reduction <add>, %0, %cst [2] : vector<2x16x64xf32> to vector<2x16xf32>
    %cst_2 = arith.constant 1.562500e-02 : f32
    %2 = vector.broadcast %cst_2 : f32 to vector<2x16xf32>
    %3 = arith.mulf %1, %2 : vector<2x16xf32>
    %c0_3 = arith.constant 0 : index
    %c0_4 = arith.constant 0 : index
    %4 = vector.load %arg2[%c0_3, %c0_4] : memref<16x4xf32, #tpu.memory_space<vmem>>, vector<16x4xf32>
    %cst_5 = arith.constant dense<0.000000e+00> : vector<2x4xf32>
    %5 = tpu.matmul %3, %4, %cst_5 {dimension_numbers = #tpu.dot_dimension_numbers<[1], [0], [0], [1], [0, 0, 1, 1], [], []>} : vector<2x16xf32>, vector<16x4xf32>, vector<2x4xf32> -> vector<2x4xf32>
    %c0_6 = arith.constant 0 : index
    %c0_7 = arith.constant 0 : index
    %6 = vector.load %arg3[%c0_6, %c0_7] : memref<1x4xf32, #tpu.memory_space<vmem>>, vector<1x4xf32>
    %7 = vector.broadcast %6 : vector<1x4xf32> to vector<2x4xf32>
    %8 = arith.addf %5, %7 : vector<2x4xf32>
    %cst_8 = arith.constant 0.000000e+00 : f32
    %9 = vector.broadcast %cst_8 : f32 to vector<2x4xf32>
    %10 = arith.maximumf %8, %9 : vector<2x4xf32>
    %c0_9 = arith.constant 0 : index
    %c0_10 = arith.constant 0 : index
    %11 = vector.load %arg4[%c0_9, %c0_10] : memref<4x16xf32, #tpu.memory_space<vmem>>, vector<4x16xf32>
    %cst_11 = arith.constant dense<0.000000e+00> : vector<2x16xf32>
    %12 = tpu.matmul %10, %11, %cst_11 {dimension_numbers = #tpu.dot_dimension_numbers<[1], [0], [0], [1], [0, 0, 1, 1], [], []>} : vector<2x4xf32>, vector<4x16xf32>, vector<2x16xf32> -> vector<2x16xf32>
    %c0_12 = arith.constant 0 : index
    %c0_13 = arith.constant 0 : index
    %13 = vector.load %arg5[%c0_12, %c0_13] : memref<1x16xf32, #tpu.memory_space<vmem>>, vector<1x16xf32>
    %14 = vector.broadcast %13 : vector<1x16xf32> to vector<2x16xf32>
    %15 = arith.addf %12, %14 : vector<2x16xf32>
    %16 = arith.negf %15 : vector<2x16xf32>
    %17 = math.exp %16 : vector<2x16xf32>
    %cst_14 = arith.constant 1.000000e+00 : f32
    %18 = vector.broadcast %cst_14 : f32 to vector<2x16xf32>
    %19 = arith.addf %18, %17 : vector<2x16xf32>
    %20 = arith.divf %18, %19 : vector<2x16xf32>
    %21 = vector.shape_cast %20 : vector<2x16xf32> to vector<2x16x1xf32>
    %22 = vector.broadcast %21 : vector<2x16x1xf32> to vector<2x16x64xf32>
    %23 = arith.mulf %0, %22 : vector<2x16x64xf32>
    %c0_15 = arith.constant 0 : index
    %c0_16 = arith.constant 0 : index
    %c0_17 = arith.constant 0 : index
    %24 = vector.load %arg6[%c0_15, %c0_16, %c0_17] : memref<2x16x64xf32, #tpu.memory_space<vmem>>, vector<2x16x64xf32>
    tpu.vector_store %arg6[%c0_15, %c0_16, %c0_17], %23 {strides = array<i32>} : memref<2x16x64xf32, #tpu.memory_space<vmem>>, vector<2x16x64xf32>,
    return
  }
  func.func @transform_0(%arg0: i32) -> (i32, i32, i32) {
    %c0_i32 = arith.constant 0 : i32
    %c0_i32_0 = arith.constant 0 : i32
    %c0_i32_1 = arith.constant 0 : i32
    return %arg0, %c0_i32, %c0_i32_0 : i32, i32, i32
  }
  func.func @transform_1(%arg0: i32) -> (i32, i32) {
    %c0_i32 = arith.constant 0 : i32
    %c0_i32_0 = arith.constant 0 : i32
    %c0_i32_1 = arith.constant 0 : i32
    return %c0_i32, %c0_i32_0 : i32, i32
  }
  func.func @transform_2(%arg0: i32) -> (i32, i32) {
    %c0_i32 = arith.constant 0 : i32
    %c0_i32_0 = arith.constant 0 : i32
    %c0_i32_1 = arith.constant 0 : i32
    return %c0_i32, %c0_i32_0 : i32, i32
  }
  func.func @transform_3(%arg0: i32) -> (i32, i32) {
    %c0_i32 = arith.constant 0 : i32
    %c0_i32_0 = arith.constant 0 : i32
    %c0_i32_1 = arith.constant 0 : i32
    return %c0_i32, %c0_i32_0 : i32, i32
  }
  func.func @transform_4(%arg0: i32) -> (i32, i32) {
    %c0_i32 = arith.constant 0 : i32
    %c0_i32_0 = arith.constant 0 : i32
    %c0_i32_1 = arith.constant 0 : i32
    return %c0_i32, %c0_i32_0 : i32, i32
  }
  func.func @transform_5(%arg0: i32) -> (i32, i32, i32) {
    %c0_i32 = arith.constant 0 : i32
    %c0_i32_0 = arith.constant 0 : i32
    %c0_i32_1 = arith.constant 0 : i32
    return %arg0, %c0_i32, %c0_i32_0 : i32, i32, i32
  }
}

</mosaic_0001>

<llo_original>
// kernel: tpu_custom_call.1
$region0: #{tpu_custom_call.1}
  #allocation0 [shape = 'u32[]', space=smem, size = 0x4, offset = 0x4, fixed_abs, tag = 'smem constant byte address 0x4 - core index']
  #allocation1 [shape = 'u32[144,128]{1,0:T(1,128)}', space=vmem, size = 0x12000, scoped, tag = 'internal scratch']
  %s0 = inlined_call_operand.hbm [shape: f32[3,16,64], index: 0, kind: input, shape index: {}]
  %s1 = inlined_call_operand.vmem [shape: f32[16,4], index: 1, kind: input, shape index: {}]
  %s2 = inlined_call_operand.vmem [shape: f32[1,4], index: 2, kind: input, shape index: {}]
  %s3 = inlined_call_operand.vmem [shape: f32[4,16], index: 3, kind: input, shape index: {}]
  %s4 = inlined_call_operand.vmem [shape: f32[1,16], index: 4, kind: input, shape index: {}]
  %s5 = inlined_call_operand.hbm [shape: f32[3,16,64], index: 5, kind: output, shape index: {}]
  %s6 = sld [smem:[#allocation0]]
  $region57: #{tpu_custom_call.1} parent=0
    _
  %s8 = ssub.s32 1, %s6
  %s9 = scalar_select 0, %s8, %s6
  $region1: #{tpu_custom_call.1} parent=0
    #allocation2 [shape = 'u8[32768]{0}', space=vmem, size = 0x8000, scoped, tag = 'input window, operand 0']
    #allocation3 [shape = 's32[2]{0}', space=sflag, size = 0x8, scoped, tag = 'scoped memory for tpu_custom_call.1']
    #allocation4 [shape = 's32[2]{0}', space=sflag, size = 0x8, scoped, tag = 'scoped memory for tpu_custom_call.1']
    #allocation5 [shape = 'u8[32768]{0}', space=vmem, size = 0x8000, scoped, tag = 'output window, operand 0']
    %10 = vsyncpa [#allocation3], 0
    %s11 = scalar_lea.sflag [#allocation3], 1
    %12 = vsyncpa %s11, 0
    %13 = vsyncpa [#allocation4], 0
    %s14 = scalar_lea.sflag [#allocation4], 1
    %15 = vsyncpa %s14, 0
    loop: start=0, step=1, limit=4
    $region2: #{tpu_custom_call.1} parent=1 // loop_pre_header
      _
    $region3: #{tpu_custom_call.1} parent=1 // loop_header
      %s17 = sphi 0, %s21
      %p18 = scmp.ge.s32.totalorder %s17, 4
      %s27 = sphi 0, %s29
      %s30 = sphi 0, %s27
      %s31 = sphi 0, %s30
      %s47 = sphi 0, %s31
      %s51 = sphi 0, %s51
      %s53 = sphi 0, %s51
      %s54 = sphi 0, %s53
      %s68 = sphi 0, %s54
      %s72 = sphi 0, %s72
      %s74 = sphi 0, %s72
      %s75 = sphi 0, %s74
      %s89 = sphi 0, %s75
      %s93 = sphi 0, %s93
      %s95 = sphi 0, %s93
      %s96 = sphi 0, %s95
      %s110 = sphi 0, %s96
      %s114 = sphi 0, %s114
      %s116 = sphi 0, %s114
      %s117 = sphi 0, %s116
      %s131 = sphi 0, %s117
      %s137 = sphi 0, %s139
      %s140 = sphi 0, %s137
      %s141 = sphi 0, %s140
      %s157 = sphi 0, %s141
    $region4: #{tpu_custom_call.1} parent=1 // loop_header_branch
      %20 = sbr.rel (%p18) target = $region8
    $region5: #{tpu_custom_call.1} parent=1 // loop_body
      %s22 = ssub.s32 %s17, 1
      %s23 = ssub.s32 %s17, 2
      %s24 = sadd.s32 %s17, 1
      %s25 = ssub.s32 %s17, %s24
      %p26 = scmp.eq.s32.totalorder %s25, 0
      %s28 = sadd.s32 %s27, 1
      %s29 = scalar_select %p26, %s27, %s28
      %p32 = pneg %p26
      %p33 = scmp.eq.s32.totalorder %s17, 1
      %p34 = por %p32, %p33
      %p35 = scmp.ne.s32.totalorder %s27, %s30
      %p36 = scmp.eq.s32.totalorder %s17, 0
      %p37 = por %p35, %p36
      %p38 = scmp.ne.s32.totalorder %s27, %s30
      %p39 = scmp.eq.s32.totalorder %s22, 1
      %p40 = por %p38, %p39
      %p41 = scmp.ne.s32.totalorder %s30, %s31
      %p42 = scmp.eq.s32.totalorder %s22, 0
      %p43 = por %p41, %p42
      %p44 = scmp.ne.s32.totalorder %s30, %s31
      %p45 = scmp.eq.s32.totalorder %s23, 1
      %p46 = por %p44, %p45
      %p48 = scmp.ne.s32.totalorder %s31, %s47
      %p49 = scmp.eq.s32.totalorder %s23, 0
      %p50 = por %p48, %p49
      %s52 = sadd.s32 %s51, 1
      %p55 = scmp.eq.s32.totalorder %s17, 1
      %p56 = scmp.ne.s32.totalorder %s51, %s53
      %p57 = scmp.eq.s32.totalorder %s17, 0
      %p58 = por %p56, %p57
      %p59 = scmp.ne.s32.totalorder %s51, %s53
      %p60 = scmp.eq.s32.totalorder %s22, 1
      %p61 = por %p59, %p60
      %p62 = scmp.ne.s32.totalorder %s53, %s54
      %p63 = scmp.eq.s32.totalorder %s22, 0
      %p64 = por %p62, %p63
      %p65 = scmp.ne.s32.totalorder %s53, %s54
      %p66 = scmp.eq.s32.totalorder %s23, 1
      %p67 = por %p65, %p66
      %p69 = scmp.ne.s32.totalorder %s54, %s68
      %p70 = scmp.eq.s32.totalorder %s23, 0
      %p71 = por %p69, %p70
      %s73 = sadd.s32 %s72, 1
      %p76 = scmp.eq.s32.totalorder %s17, 1
      %p77 = scmp.ne.s32.totalorder %s72, %s74
      %p78 = scmp.eq.s32.totalorder %s17, 0
      %p79 = por %p77, %p78
      %p80 = scmp.ne.s32.totalorder %s72, %s74
      %p81 = scmp.eq.s32.totalorder %s22, 1
      %p82 = por %p80, %p81
      %p83 = scmp.ne.s32.totalorder %s74, %s75
      %p84 = scmp.eq.s32.totalorder %s22, 0
      %p85 = por %p83, %p84
      %p86 = scmp.ne.s32.totalorder %s74, %s75
      %p87 = scmp.eq.s32.totalorder %s23, 1
      %p88 = por %p86, %p87
      %p90 = scmp.ne.s32.totalorder %s75, %s89
      %p91 = scmp.eq.s32.totalorder %s23, 0
      %p92 = por %p90, %p91
      %s94 = sadd.s32 %s93, 1
      %p97 = scmp.eq.s32.totalorder %s17, 1
      %p98 = scmp.ne.s32.totalorder %s93, %s95
      %p99 = scmp.eq.s32.totalorder %s17, 0
      %p100 = por %p98, %p99
      %p101 = scmp.ne.s32.totalorder %s93, %s95
      %p102 = scmp.eq.s32.totalorder %s22, 1
      %p103 = por %p101, %p102
      %p104 = scmp.ne.s32.totalorder %s95, %s96
      %p105 = scmp.eq.s32.totalorder %s22, 0
      %p106 = por %p104, %p105
      %p107 = scmp.ne.s32.totalorder %s95, %s96
      %p108 = scmp.eq.s32.totalorder %s23, 1
      %p109 = por %p107, %p108
      %p111 = scmp.ne.s32.totalorder %s96, %s110
      %p112 = scmp.eq.s32.totalorder %s23, 0
      %p113 = por %p111, %p112
      %s115 = sadd.s32 %s114, 1
      %p118 = scmp.eq.s32.totalorder %s17, 1
      %p119 = scmp.ne.s32.totalorder %s114, %s116
      %p120 = scmp.eq.s32.totalorder %s17, 0
      %p121 = por %p119, %p120
      %p122 = scmp.ne.s32.totalorder %s114, %s116
      %p123 = scmp.eq.s32.totalorder %s22, 1
      %p124 = por %p122, %p123
      %p125 = scmp.ne.s32.totalorder %s116, %s117
      %p126 = scmp.eq.s32.totalorder %s22, 0
      %p127 = por %p125, %p126
      %p128 = scmp.ne.s32.totalorder %s116, %s117
      %p129 = scmp.eq.s32.totalorder %s23, 1
      %p130 = por %p128, %p129
      %p132 = scmp.ne.s32.totalorder %s117, %s131
      %p133 = scmp.eq.s32.totalorder %s23, 0
      %p134 = por %p132, %p133
      %s135 = ssub.s32 %s17, %s24
      %p136 = scmp.eq.s32.totalorder %s135, 0
      %s138 = sadd.s32 %s137, 1
      %s139 = scalar_select %p136, %s137, %s138
      %p142 = pneg %p136
      %p143 = scmp.eq.s32.totalorder %s17, 1
      %p144 = por %p142, %p143
      %p145 = scmp.ne.s32.totalorder %s137, %s140
      %p146 = scmp.eq.s32.totalorder %s17, 0
      %p147 = por %p145, %p146
      %p148 = scmp.ne.s32.totalorder %s137, %s140
      %p149 = scmp.eq.s32.totalorder %s22, 1
      %p150 = por %p148, %p149
      %p151 = scmp.ne.s32.totalorder %s140, %s141
      %p152 = scmp.eq.s32.totalorder %s22, 0
      %p153 = por %p151, %p152
      %p154 = scmp.ne.s32.totalorder %s140, %s141
      %p155 = scmp.eq.s32.totalorder %s23, 1
      %p156 = por %p154, %p155
      %p158 = scmp.ne.s32.totalorder %s141, %s157
      %p159 = scmp.eq.s32.totalorder %s23, 0
      %p160 = por %p158, %p159
      %p161 = scmp.le.s32.totalorder 1, %s17
      %p162 = scmp.lt.s32.totalorder %s17, 3
      %p163 = pnand %p161, %p162
      %p164 = pneg %p163
      // Predicated region
      $region9: #{tpu_custom_call.1} parent=5 // pred_check
        _
      $region10: #{tpu_custom_call.1} parent=5 // pred_check_branch
        %166 = sbr.rel (%p163) target = $region12
      $region11: #{tpu_custom_call.1} parent=5 // pred_region
        %s167 = ssub.s32 %s17, 1
        // Predicated region
        $region13: #{tpu_custom_call.1} parent=11 // pred_check
          %p168 = pneg %p64
        $region14: #{tpu_custom_call.1} parent=11 // pred_check_branch
          %170 = sbr.rel (%p168) target = $region16
        $region15: #{tpu_custom_call.1} parent=11 // pred_region
          _
        $region16: #{tpu_custom_call.1} parent=11 // pred_fallthru
          _
        // Predicated region
        $region17: #{tpu_custom_call.1} parent=11 // pred_check
          %p171 = pneg %p85
        $region18: #{tpu_custom_call.1} parent=11 // pred_check_branch
          %173 = sbr.rel (%p171) target = $region20
        $region19: #{tpu_custom_call.1} parent=11 // pred_region
          _
        $region20: #{tpu_custom_call.1} parent=11 // pred_fallthru
          _
        // Predicated region
        $region21: #{tpu_custom_call.1} parent=11 // pred_check
          %p174 = pneg %p106
        $region22: #{tpu_custom_call.1} parent=11 // pred_check_branch
          %176 = sbr.rel (%p174) target = $region24
        $region23: #{tpu_custom_call.1} parent=11 // pred_region
          _
        $region24: #{tpu_custom_call.1} parent=11 // pred_fallthru
          _
        // Predicated region
        $region25: #{tpu_custom_call.1} parent=11 // pred_check
          %p177 = pneg %p127
        $region26: #{tpu_custom_call.1} parent=11 // pred_check_branch
          %179 = sbr.rel (%p177) target = $region28
        $region27: #{tpu_custom_call.1} parent=11 // pred_region
          _
        $region28: #{tpu_custom_call.1} parent=11 // pred_fallthru
          _
      $region12: #{tpu_custom_call.1} parent=5 // pred_fallthru
        _
      %p180 = scmp.lt.s32.totalorder %s17, 2
      // Predicated region
      $region29: #{tpu_custom_call.1} parent=5 // pred_check
        %p181 = pneg %p180
      $region30: #{tpu_custom_call.1} parent=5 // pred_check_branch
        %183 = sbr.rel (%p181) target = $region32
      $region31: #{tpu_custom_call.1} parent=5 // pred_region
        // Predicated region
        $region33: #{tpu_custom_call.1} parent=31 // pred_check
          %p184 = pneg %p37
        $region34: #{tpu_custom_call.1} parent=31 // pred_check_branch
          %186 = sbr.rel (%p184) target = $region36
        $region35: #{tpu_custom_call.1} parent=31 // pred_region
          %s187 = sand.u32 %s27, 1
          %s188 = scalar_lea.sflag [#allocation3], %s187
          %s189 = sand.u32 %s27, 1
          %s190 = smul.addr %s189, 32
          %s191 = scalar_lea.vmem [#allocation2], %s190
          %s192 = smul.u32 2, %s17
          %s193 = ssub.s32 3, %s192
          %p194 = scmp.lt.s32.totalorder %s193, 2
          %s195 = scalar_select %p194, %s193, 2
          %s196 = smul.u32 128, %s195
          %s197 = smul.u32 %s196, 2
          %s199 = ssub.s32 512, %s197
          %200 = vsyncadd %s188, %s199
          %p201 = scmp.ne.s32.totalorder 0, %s197
          %s202 = smul.addr %s192, 2
          %s203 = smul.addr %s202, 128
          %s204 = scalar_lea.hbm %s0, %s203
          %s205 = smul.u32 %s195, 2
          %s206 = smul.u32 8, %s205
          %s207 = sshll.u32 %s191, 4
          %s208 = int_to_ptr.vmem [resolvable:$true] %s207
          %s209 = sshll.u32 %s206, 4
          %213 = dma.hbm_to_vmem [thread:$0]  (%p201), %s204, %s209, %s208, %s188, 128, 128, 8
        $region36: #{tpu_custom_call.1} parent=31 // pred_fallthru
          _
      $region32: #{tpu_custom_call.1} parent=5 // pred_fallthru
        _
      %p214 = scmp.le.s32.totalorder 1, %s17
      %p215 = scmp.lt.s32.totalorder %s17, 3
      %p216 = pnand %p214, %p215
      %p217 = pneg %p216
      // Predicated region
      $region37: #{tpu_custom_call.1} parent=5 // pred_check
        _
      $region38: #{tpu_custom_call.1} parent=5 // pred_check_branch
        %219 = sbr.rel (%p216) target = $region40
      $region39: #{tpu_custom_call.1} parent=5 // pred_region
        %s220 = ssub.s32 %s17, 1
        %s221 = sand.u32 %s30, 1
        %s222 = scalar_lea.sflag [#allocation3], %s221
        %s223 = sand.u32 %s30, 1
        %s224 = smul.addr %s223, 32
        %s225 = scalar_lea.vmem [#allocation2], %s224
        // Predicated region
        $region41: #{tpu_custom_call.1} parent=39 // pred_check
          %p226 = pneg %p43
        $region42: #{tpu_custom_call.1} parent=39 // pred_check_branch
          %228 = sbr.rel (%p226) target = $region44
        $region43: #{tpu_custom_call.1} parent=39 // pred_region
          %229 = dma.done %s222, 512
        $region44: #{tpu_custom_call.1} parent=39 // pred_fallthru
          _
        %s230 = sand.u32 %s30, 1
        %s231 = scalar_lea.sflag [#allocation3], %s230
        %s232 = sand.u32 %s30, 1
        %s233 = smul.addr %s232, 32
        %s234 = scalar_lea.vmem [#allocation2], %s233
        %p235 = pneg %p43
        %p236 = pneg %p40
        %p237 = pneg %p64
        %p238 = pneg %p61
        %p239 = pneg %p85
        %p240 = pneg %p82
        %p241 = pneg %p106
        %p242 = pneg %p103
        %p243 = pneg %p127
        %p244 = pneg %p124
        %p245 = pneg %p153
        %p246 = pneg %p150
        %s247 = sand.u32 %s140, 1
        %s248 = scalar_lea.sflag [#allocation4], %s247
        %s249 = sand.u32 %s140, 1
        %s250 = smul.addr %s249, 32
        %s251 = scalar_lea.vmem [#allocation5], %s250
        %s252 = smul.u32 2, %s22
        %s253 = ssub.s32 3, %s252
        %p254 = scmp.lt.s32.totalorder %s253, 2
        %s255 = scalar_select %p254, %s253, 2
        %s256 = smul.u32 128, %s255
        %s257 = smul.u32 %s256, 2
        %s258 = smul.u32 2, %s22
        %s259 = ssub.s32 3, %s258
        %p260 = scmp.lt.s32.totalorder %s259, 2
        %s261 = scalar_select %p260, %s259, 2
        %s262 = smul.u32 128, %s261
        %s263 = smul.u32 %s262, 2
        %v264 = vld [vmem:[%s225] sm:$0xff]
        %v265 = vld [vmem:[%s225 + $0x8] sm:$0xff]
        %v266 = vld [vmem:[%s225 + $0x10] sm:$0xff]
        %v267 = vld [vmem:[%s225 + $0x18] sm:$0xff]
        %vm268 = vcmask 523264
        %v269 = vsel %vm268, %v264, 0.0
        %270 = vadd.xlane.f32.xlu0 %v269
        %v271 = vpop.xlane.xlu0 %270
        %v272 = vsel %vm268, %v265, 0.0
        %273 = vadd.xlane.f32.xlu0 %v272
        %v274 = vpop.xlane.xlu0 %273
        %v275 = vsel %vm268, %v266, 0.0
        %276 = vadd.xlane.f32.xlu0 %v275
        %v277 = vpop.xlane.xlu0 %276
        %v278 = vsel %vm268, %v267, 0.0
        %279 = vadd.xlane.f32.xlu0 %v278
        %v280 = vpop.xlane.xlu0 %279
        %v281 = vmul.f32 %v271, 0.015625
        %v282 = vmul.f32 %v274, 0.015625
        %v283 = vmul.f32 %v277, 0.015625
        %v284 = vmul.f32 %v280, 0.015625
        %v285 = vld [vmem:[%s1] sm:$0xff]
        %v286 = vld [vmem:[%s1 + $0x8] sm:$0xff]
        %v287 = vld [vmem:[%s2] sm:$0x1]
        %v289 = vlaneseq
        %v290 = vshrl.u32 %v289, 7
        %v291 = vsub.s32 0, %v290
        %v292 = vrot.slane %v287, %v291
        %v298 = vlaneseq
        %v299 = vand.u32 %v298, 127
        %v300 = vlaneseq
        %v301 = vshrl.u32 %v300, 7
        %v302 = vsub.s32 %v299, %v301
        %v303 = vrot.slane %v281, %v302
        %v304 = vadd.s32 %v299, 4294967288
        %v305 = vlaneseq
        %v306 = vshrl.u32 %v305, 7
        %v307 = vsub.s32 %v304, %v306
        %v308 = vrot.slane %v282, %v307
        %vm309 = vcmask 130112
        %v310 = vsel %vm309, %v308, %v303
        %v311 = vlaneseq
        %v312 = vshrl.u32 %v311, 7
        %v313 = vsub.s32 %v299, %v312
        %v314 = vrot.slane %v283, %v313
        %v315 = vlaneseq
        %v316 = vshrl.u32 %v315, 7
        %v317 = vsub.s32 %v304, %v316
        %v318 = vrot.slane %v284, %v317
        %v319 = vsel %vm309, %v318, %v314
        %vm320 = vcmask 1041409
        %v321 = vsel %vm320, %v319, %v310
        %vm322 = vcmask 130048
        %v323 = vsel %vm322, %v321, 0
        %325 = vmatprep.subr.mxu0 0.0
        %326 = vmatpush1.msra.mxu0 %v285
        %327 = vmatprep.subr.mxu0 0.0
        %328 = vmatpush1.msra.mxu0 %v286
        %329 = vmatprep.subr.mxu0 0.0
        %330 = vmatpush1.msra.mxu0 0.0
        %331 = vmatprep.subr.mxu0 0.0
        %332 = vmatpush1.msra.mxu0 0.0
        %333 = vmatprep.subr.mxu0 0.0
        %334 = vmatpush1.msra.mxu0 0.0
        %335 = vmatprep.subr.mxu0 0.0
        %336 = vmatpush1.msra.mxu0 0.0
        %337 = vmatprep.subr.mxu0 0.0
        %338 = vmatpush1.msra.mxu0 0.0
        %339 = vmatprep.subr.mxu0 0.0
        %340 = vmatpush1.msra.mxu0 0.0
        %341 = vmatprep.subr.mxu0 0.0
        %342 = vmatpush1.msra.mxu0 0.0
        %343 = vmatprep.subr.mxu0 0.0
        %344 = vmatpush1.msra.mxu0 0.0
        %345 = vmatprep.subr.mxu0 0.0
        %346 = vmatpush1.msra.mxu0 0.0
        %347 = vmatprep.subr.mxu0 0.0
        %348 = vmatpush1.msra.mxu0 0.0
        %349 = vmatprep.subr.mxu0 0.0
        %350 = vmatpush1.msra.mxu0 0.0
        %351 = vmatprep.subr.mxu0 0.0
        %352 = vmatpush1.msra.mxu0 0.0
        %353 = vmatprep.subr.mxu0 0.0
        %354 = vmatpush1.msra.mxu0 0.0
        %355 = vmatprep.subr.mxu0 0.0
        %356 = vmatpush1.msra.mxu0 0.0
        %357 = vmatprep.subr.mxu0 0.0
        %358 = vmatpush1.msra.mxu0 0.0
        %359 = vmatprep.subr.mxu0 0.0
        %360 = vmatpush1.msra.mxu0 0.0
        %361 = vmatprep.subr.mxu0 0.0
        %362 = vmatpush1.msra.mxu0 0.0
        %363 = vmatprep.subr.mxu0 0.0
        %364 = vmatpush1.msra.mxu0 0.0
        %365 = vmatprep.subr.mxu0 0.0
        %366 = vmatpush1.msra.mxu0 0.0
        %367 = vmatprep.subr.mxu0 0.0
        %368 = vmatpush1.msra.mxu0 0.0
        %369 = vmatprep.subr.mxu0 0.0
        %370 = vmatpush1.msra.mxu0 0.0
        %371 = vmatprep.subr.mxu0 0.0
        %372 = vmatpush1.msra.mxu0 0.0
        %373 = vmatprep.subr.mxu0 0.0
        %374 = vmatpush1.msra.mxu0 0.0
        %375 = vmatprep.subr.mxu0 0.0
        %376 = vmatpush1.msra.mxu0 0.0
        %377 = vmatprep.subr.mxu0 0.0
        %378 = vmatpush1.msra.mxu0 0.0
        %379 = vmatprep.subr.mxu0 0.0
        %380 = vmatpush1.msra.mxu0 0.0
        %381 = vmatprep.subr.mxu0 0.0
        %382 = vmatpush1.msra.mxu0 0.0
        %383 = vmatprep.subr.mxu0 0.0
        %384 = vmatpush1.msra.mxu0 0.0
        %385 = vmatprep.subr.mxu0 0.0
        %386 = vmatpush1.msra.mxu0 0.0
        %387 = vmatprep.subr.mxu0 0.0
        %388 = vmatpush1.msra.mxu0 0.0
        %389 = vmatprep.mubr.f32.mxu0 0.0
        %390 = vmatmul.mubr.f32.gmra.mrb[0].mxu0 %v323
        %v391 = vpop.f32.mrb[0].mxu0
        %v392 = vadd.f32 %v292, %v391
        %v393 = vpop.f32.mrb[0].mxu0
        %394 = vdwg.mxu0
        %v395 = vmax.f32 %v392, 0.0
        %v396 = vld [vmem:[%s3] sm:$0xf]
        %v397 = vld [vmem:[%s4] sm:$0x1]
        %v399 = vlaneseq
        %v400 = vshrl.u32 %v399, 7
        %v401 = vsub.s32 0, %v400
        %v402 = vrot.slane %v397, %v401
        %vm404 = vcmask 31744
        %v406 = vsel %vm404, %v395, 0
        %vm408 = vcmask 1043456
        %v410 = vsel %vm408, %v396, 0
        %412 = vmatprep.subr.mxu0 0.0
        %413 = vmatpush1.msra.mxu0 %v410
        %414 = vmatprep.subr.mxu0 0.0
        %415 = vmatpush1.msra.mxu0 0.0
        %416 = vmatprep.subr.mxu0 0.0
        %417 = vmatpush1.msra.mxu0 0.0
        %418 = vmatprep.subr.mxu0 0.0
        %419 = vmatpush1.msra.mxu0 0.0
        %420 = vmatprep.subr.mxu0 0.0
        %421 = vmatpush1.msra.mxu0 0.0
        %422 = vmatprep.subr.mxu0 0.0
        %423 = vmatpush1.msra.mxu0 0.0
        %424 = vmatprep.subr.mxu0 0.0
        %425 = vmatpush1.msra.mxu0 0.0
        %426 = vmatprep.subr.mxu0 0.0
        %427 = vmatpush1.msra.mxu0 0.0
        %428 = vmatprep.subr.mxu0 0.0
        %429 = vmatpush1.msra.mxu0 0.0
        %430 = vmatprep.subr.mxu0 0.0
        %431 = vmatpush1.msra.mxu0 0.0
        %432 = vmatprep.subr.mxu0 0.0
        %433 = vmatpush1.msra.mxu0 0.0
        %434 = vmatprep.subr.mxu0 0.0
        %435 = vmatpush1.msra.mxu0 0.0
        %436 = vmatprep.subr.mxu0 0.0
        %437 = vmatpush1.msra.mxu0 0.0
        %438 = vmatprep.subr.mxu0 0.0
        %439 = vmatpush1.msra.mxu0 0.0
        %440 = vmatprep.subr.mxu0 0.0
        %441 = vmatpush1.msra.mxu0 0.0
        %442 = vmatprep.subr.mxu0 0.0
        %443 = vmatpush1.msra.mxu0 0.0
        %444 = vmatprep.subr.mxu0 0.0
        %445 = vmatpush1.msra.mxu0 0.0
        %446 = vmatprep.subr.mxu0 0.0
        %447 = vmatpush1.msra.mxu0 0.0
        %448 = vmatprep.subr.mxu0 0.0
        %449 = vmatpush1.msra.mxu0 0.0
        %450 = vmatprep.subr.mxu0 0.0
        %451 = vmatpush1.msra.mxu0 0.0
        %452 = vmatprep.subr.mxu0 0.0
        %453 = vmatpush1.msra.mxu0 0.0
        %454 = vmatprep.subr.mxu0 0.0
        %455 = vmatpush1.msra.mxu0 0.0
        %456 = vmatprep.subr.mxu0 0.0
        %457 = vmatpush1.msra.mxu0 0.0
        %458 = vmatprep.subr.mxu0 0.0
        %459 = vmatpush1.msra.mxu0 0.0
        %460 = vmatprep.subr.mxu0 0.0
        %461 = vmatpush1.msra.mxu0 0.0
        %462 = vmatprep.subr.mxu0 0.0
        %463 = vmatpush1.msra.mxu0 0.0
        %464 = vmatprep.subr.mxu0 0.0
        %465 = vmatpush1.msra.mxu0 0.0
        %466 = vmatprep.subr.mxu0 0.0
        %467 = vmatpush1.msra.mxu0 0.0
        %468 = vmatprep.subr.mxu0 0.0
        %469 = vmatpush1.msra.mxu0 0.0
        %470 = vmatprep.subr.mxu0 0.0
        %471 = vmatpush1.msra.mxu0 0.0
        %472 = vmatprep.subr.mxu0 0.0
        %473 = vmatpush1.msra.mxu0 0.0
        %474 = vmatprep.subr.mxu0 0.0
        %475 = vmatpush1.msra.mxu0 0.0
        %476 = vmatprep.mubr.f32.mxu0 0.0
        %477 = vmatmul.mubr.f32.gmra.mrb[0].mxu0 %v406
        %v478 = vpop.f32.mrb[0].mxu0
        %v479 = vadd.f32 %v402, %v478
        %v480 = vpop.f32.mrb[0].mxu0
        %481 = vdwg.mxu0
        %v482 = vxor.u32 %v479, 2147483648
        %v483 = vmul.f32 %v482, 1.442695
        %v484 = vpow.pop %v483
        %v485 = vadd.f32 %v484, 1.0
        %v486 = vrcp.pop %v485
        %v487 = vmul.f32 1.0, %v486
        %v488 = vlaneseq
        %v489 = vshrl.u32 %v488, 7
        %v490 = vsub.s32 0, %v489
        %v491 = vrot.slane %v487, %v490
        %493 = vbcast.lane.b32.xlu0 %v491, 256
        %v494 = vpop.permute.xlu0 %493
        %s496 = sor.u32 256, 8
        %497 = vbcast.lane.b32.xlu0 %v491, %s496
        %v498 = vpop.permute.xlu0 %497
        %v499 = vlaneseq
        %v500 = vshrl.u32 %v499, 7
        %v501 = vsub.s32 1, %v500
        %v502 = vrot.slane %v487, %v501
        %504 = vbcast.lane.b32.xlu0 %v502, 256
        %v505 = vpop.permute.xlu0 %504
        %s507 = sor.u32 256, 8
        %508 = vbcast.lane.b32.xlu0 %v502, %s507
        %v509 = vpop.permute.xlu0 %508
        %v510 = vmul.f32 %v264, %v494
        %v511 = vmul.f32 %v265, %v498
        %v512 = vmul.f32 %v266, %v505
        %v513 = vmul.f32 %v267, %v509
        %514 = vst.msk [vmem:[%s251] sm:$0xff] %vm268, %v510
        %515 = vst.msk [vmem:[%s251 + $0x8] sm:$0xff] %vm268, %v511
        %516 = vst.msk [vmem:[%s251 + $0x10] sm:$0xff] %vm268, %v512
        %517 = vst.msk [vmem:[%s251 + $0x18] sm:$0xff] %vm268, %v513
        %s518 = sand.u32 %s140, 1
        %s519 = scalar_lea.sflag [#allocation4], %s518
        %s520 = sand.u32 %s140, 1
        %s521 = smul.addr %s520, 32
        %s522 = scalar_lea.vmem [#allocation5], %s521
        // Predicated region
        $region45: #{tpu_custom_call.1} parent=39 // pred_check
          %p523 = pneg %p150
        $region46: #{tpu_custom_call.1} parent=39 // pred_check_branch
          %525 = sbr.rel (%p523) target = $region48
        $region47: #{tpu_custom_call.1} parent=39 // pred_region
          %s526 = smul.u32 2, %s22
          %s527 = ssub.s32 3, %s526
          %p528 = scmp.lt.s32.totalorder %s527, 2
          %s529 = scalar_select %p528, %s527, 2
          %s530 = smul.u32 128, %s529
          %s531 = smul.u32 %s530, 2
          %s533 = ssub.s32 512, %s531
          %534 = vsyncadd %s519, %s533
          %p535 = scmp.ne.s32.totalorder 0, %s531
          %s536 = smul.addr %s526, 2
          %s537 = smul.addr %s536, 128
          %s538 = scalar_lea.hbm %s5, %s537
          %s539 = smul.u32 %s529, 2
          %s540 = smul.u32 8, %s539
          %s541 = sshll.u32 %s522, 4
          %s542 = int_to_ptr.vmem [resolvable:$true] %s541
          %s543 = sshll.u32 %s540, 4
          %547 = dma.vmem_to_hbm [thread:$0]  (%p535), %s542, %s543, %s538, %s519, 128, 128, 8
        $region48: #{tpu_custom_call.1} parent=39 // pred_fallthru
          _
      $region40: #{tpu_custom_call.1} parent=5 // pred_fallthru
        _
      %p548 = scmp.le.s32.totalorder 2, %s17
      // Predicated region
      $region49: #{tpu_custom_call.1} parent=5 // pred_check
        %p549 = pneg %p548
      $region50: #{tpu_custom_call.1} parent=5 // pred_check_branch
        %551 = sbr.rel (%p549) target = $region52
      $region51: #{tpu_custom_call.1} parent=5 // pred_region
        %s552 = ssub.s32 %s17, 2
        // Predicated region
        $region53: #{tpu_custom_call.1} parent=51 // pred_check
          %p553 = pneg %p156
        $region54: #{tpu_custom_call.1} parent=51 // pred_check_branch
          %555 = sbr.rel (%p553) target = $region56
        $region55: #{tpu_custom_call.1} parent=51 // pred_region
          %s556 = sand.u32 %s141, 1
          %s557 = scalar_lea.sflag [#allocation4], %s556
          %s558 = sand.u32 %s141, 1
          %s559 = smul.addr %s558, 32
          %s560 = scalar_lea.vmem [#allocation5], %s559
          %561 = dma.done %s557, 512
        $region56: #{tpu_custom_call.1} parent=51 // pred_fallthru
          _
      $region52: #{tpu_custom_call.1} parent=5 // pred_fallthru
        _
    $region6: #{tpu_custom_call.1} parent=1 // loop_footer
      %s21 = sadd.s32 1, %s17
    $region7: #{tpu_custom_call.1} parent=1 // loop_footer_branch
      %16 = sbr.rel target = $region3
    $region8: #{tpu_custom_call.1} parent=1 // loop_exit
      _
    %562 = vsyncpa [#allocation3], 1
    %s563 = scalar_lea.sflag [#allocation3], 1
    %564 = vsyncpa %s563, 1
    %565 = vsyncpa [#allocation4], 1
    %s566 = scalar_lea.sflag [#allocation4], 1
    %567 = vsyncpa %s566, 1

</llo_original>
